<compile_context>
chip_gen: v7x
topology: tpu7x:2x2x1
jax: 0.10.0
libtpu: 0.0.40
codegen_flags: <defaults>
</compile_context>

<pallas_src>
import functools

import jax
import jax.numpy as jnp
from jax.experimental import pallas as pl
from jax.experimental.pallas import tpu as pltpu

LANE = 128


def _fused_scale_bias(sum_c, sumsq_c, rho, gamma, beta, *, hw, c, eps):
    """From per-channel sum / sumsq over spatial dims (f32, (1, C, 1)) compute
    the fused per-channel (scale, bias) so that out = x * scale + bias
    reproduces: gamma*(rho*IN(x) + (1-rho)*LN(x)) + beta with unbiased var."""
    hw_f = jnp.float32(hw)
    chw_f = jnp.float32(c * hw)

    # Instance-norm stats (per channel, over HW).
    in_mean = sum_c / hw_f                                    # (1, C, 1)
    in_css = jnp.maximum(sumsq_c - hw_f * in_mean * in_mean, 0.0)
    in_var = in_css / jnp.float32(max(hw - 1, 1))
    rstd_in = jax.lax.rsqrt(in_var + jnp.float32(eps))

    # Layer-norm stats derived from the same partial sums (over C*HW).
    tot_sum = jnp.sum(sum_c, axis=1, keepdims=True)           # (1, 1, 1)
    tot_sumsq = jnp.sum(sumsq_c, axis=1, keepdims=True)
    ln_mean = tot_sum / chw_f
    ln_css = jnp.maximum(tot_sumsq - chw_f * ln_mean * ln_mean, 0.0)
    ln_var = ln_css / jnp.float32(max(c * hw - 1, 1))
    rstd_ln = jax.lax.rsqrt(ln_var + jnp.float32(eps))

    mix_scale = rho * rstd_in + (1.0 - rho) * rstd_ln         # (1, C, 1)
    mix_bias = -(rho * in_mean * rstd_in + (1.0 - rho) * ln_mean * rstd_ln)
    scale = gamma * mix_scale
    bias = gamma * mix_bias + beta
    return scale, bias


def _iln_fused_kernel(x_ref, rho_ref, gamma_ref, beta_ref, o_ref, *, eps, hw, c):
    """Whole-image path: one pass over x for stats, then a single FMA apply."""
    xf = x_ref[...].astype(jnp.float32)                       # (1, C, HW)
    sum_c = jnp.sum(xf, axis=2, keepdims=True)                # (1, C, 1)
    sumsq_c = jnp.sum(xf * xf, axis=2, keepdims=True)         # (1, C, 1)
    scale, bias = _fused_scale_bias(
        sum_c, sumsq_c, rho_ref[...], gamma_ref[...], beta_ref[...],
        hw=hw, c=c, eps=eps)
    # Re-read x for the apply so the f32 upcast need not stay live across the
    # (tiny) scale/bias computation — keeps peak VMEM lower for bf16 inputs.
    o_ref[...] = (x_ref[...].astype(jnp.float32) * scale + bias).astype(o_ref.dtype)


def _iln_stats_kernel(x_ref, rho_ref, gamma_ref, beta_ref, scale_ref, bias_ref,
                      sum_sc, sumsq_sc, *, eps, hw, c, thw, rem):
    """Tiled path, pass 1: accumulate per-channel sum/sumsq over HW tiles and
    emit the fused per-(n, c) scale/bias at the last tile.  The ragged last
    tile (rem != 0) is masked with a lane iota so no HBM padding is needed."""
    t = pl.program_id(1)
    nt = pl.num_programs(1)

    @pl.when(t == 0)
    def _():
        sum_sc[...] = jnp.zeros_like(sum_sc)
        sumsq_sc[...] = jnp.zeros_like(sumsq_sc)

    x = x_ref[...].astype(jnp.float32)                        # (1, C, THW)
    if rem:
        valid = jnp.where(t == nt - 1, rem, thw)              # scalar lane count
        lane = jax.lax.broadcasted_iota(jnp.int32, x.shape, 2)
        x = jnp.where(lane < valid, x, 0.0)
    sum_sc[...] += jnp.sum(x, axis=2, keepdims=True)
    sumsq_sc[...] += jnp.sum(x * x, axis=2, keepdims=True)

    @pl.when(t == nt - 1)
    def _():
        scale, bias = _fused_scale_bias(
            sum_sc[...], sumsq_sc[...],
            rho_ref[...], gamma_ref[...], beta_ref[...],
            hw=hw, c=c, eps=eps)
        scale_ref[...] = scale
        bias_ref[...] = bias


def _iln_apply_kernel(x_ref, scale_ref, bias_ref, o_ref):
    """Tiled path, pass 2: per-element FMA with per-channel scale/bias.
    Out-of-bounds lanes of the ragged last tile are masked writes by Pallas."""
    o_ref[...] = (x_ref[...].astype(jnp.float32) * scale_ref[...]
                  + bias_ref[...]).astype(o_ref.dtype)


def iln_forward(x_nchw, rho, gamma, beta, eps=1e-5, *,
                fused_block_bytes=None, tile_target_bytes=None,
                vmem_limit_bytes=None):
    """x_nchw: (N, C, H, W); rho/gamma/beta: (1, C, 1, 1). Returns (N, C, H, W)."""
    N, C, H, W = x_nchw.shape
    HW = H * W
    dtype = x_nchw.dtype

    # ---- generation-aware VMEM budget (v5e/v6e: 128 MiB, v7x: 64 MiB) ----
    if vmem_limit_bytes is None:
        try:
            vmem_cap = int(pltpu.get_tpu_info().vmem_capacity_bytes)
        except Exception:
            vmem_cap = 64 << 20  # conservative fallback (v7x per-TC capacity)
        vmem_limit_bytes = min((vmem_cap * 3) // 4, 100 << 20)
    if fused_block_bytes is None:
        # Fused kernel peak VMEM ~= 5-6x the f32 block (double-buffered in/out
        # + f32 temp), so keep blocks under ~limit/6.
        fused_block_bytes = vmem_limit_bytes // 6
    if tile_target_bytes is None:
        tile_target_bytes = min(8 << 20, max(2 << 20, vmem_limit_bytes // 12))

    # Free, layout-preserving views: no HBM-side padding or slicing anywhere.
    x = x_nchw.reshape(N, C, HW)
    rho3 = rho.reshape(1, C, 1).astype(jnp.float32)
    gamma3 = gamma.reshape(1, C, 1).astype(jnp.float32)
    beta3 = beta.reshape(1, C, 1).astype(jnp.float32)

    block_bytes = C * HW * 4  # f32 working size of one (1, C, HW) block

    use_fused = block_bytes <= fused_block_bytes
    thw = 0
    if not use_fused:
        thw = max(LANE, (tile_target_bytes // (C * 4)) // LANE * LANE)
        if thw >= HW:
            use_fused = True  # a single tile already covers HW; tiling buys nothing

    if use_fused:
        # Full-extent last dim (== HW) is exempt from the 128-divisibility rule,
        # so no padding is required even for ragged HW.
        kernel = functools.partial(_iln_fused_kernel, eps=eps, hw=HW, c=C)
        out = pl.pallas_call(
            kernel,
            out_shape=jax.ShapeDtypeStruct((N, C, HW), dtype),
            grid_spec=pltpu.PrefetchScalarGridSpec(
                num_scalar_prefetch=0,
                grid=(N,),
                in_specs=[
                    pl.BlockSpec((1, C, HW), lambda n: (n, 0, 0)),
                    pl.BlockSpec((1, C, 1), lambda n: (0, 0, 0)),
                    pl.BlockSpec((1, C, 1), lambda n: (0, 0, 0)),
                    pl.BlockSpec((1, C, 1), lambda n: (0, 0, 0)),
                ],
                out_specs=pl.BlockSpec((1, C, HW), lambda n: (n, 0, 0)),
            ),
            compiler_params=pltpu.CompilerParams(
                dimension_semantics=("parallel",),
                vmem_limit_bytes=vmem_limit_bytes,
            ),
        )(x, rho3, gamma3, beta3)
    else:
        # Large images: tile the HW (lane) axis; ragged last tile is masked in
        # the stats kernel (reads) and by Pallas (writes) in the apply kernel.
        n_t = -(-HW // thw)
        rem = HW % thw

        stats_kernel = functools.partial(
            _iln_stats_kernel, eps=eps, hw=HW, c=C, thw=thw, rem=rem)
        scale, bias = pl.pallas_call(
            stats_kernel,
            out_shape=(jax.ShapeDtypeStruct((N, C, 1), jnp.float32),
                       jax.ShapeDtypeStruct((N, C, 1), jnp.float32)),
            grid_spec=pltpu.PrefetchScalarGridSpec(
                num_scalar_prefetch=0,
                grid=(N, n_t),
                in_specs=[
                    pl.BlockSpec((1, C, thw), lambda n, t: (n, 0, t)),
                    pl.BlockSpec((1, C, 1), lambda n, t: (0, 0, 0)),
                    pl.BlockSpec((1, C, 1), lambda n, t: (0, 0, 0)),
                    pl.BlockSpec((1, C, 1), lambda n, t: (0, 0, 0)),
                ],
                out_specs=(pl.BlockSpec((1, C, 1), lambda n, t: (n, 0, 0)),
                           pl.BlockSpec((1, C, 1), lambda n, t: (n, 0, 0))),
                scratch_shapes=[pltpu.VMEM((1, C, 1), jnp.float32),
                                pltpu.VMEM((1, C, 1), jnp.float32)],
            ),
            compiler_params=pltpu.CompilerParams(
                dimension_semantics=("parallel", "arbitrary"),
                vmem_limit_bytes=vmem_limit_bytes,
            ),
        )(x, rho3, gamma3, beta3)

        out = pl.pallas_call(
            _iln_apply_kernel,
            out_shape=jax.ShapeDtypeStruct((N, C, HW), dtype),
            grid_spec=pltpu.PrefetchScalarGridSpec(
                num_scalar_prefetch=0,
                grid=(N, n_t),
                in_specs=[
                    pl.BlockSpec((1, C, thw), lambda n, t: (n, 0, t)),
                    pl.BlockSpec((1, C, 1), lambda n, t: (n, 0, 0)),
                    pl.BlockSpec((1, C, 1), lambda n, t: (n, 0, 0)),
                ],
                out_specs=pl.BlockSpec((1, C, thw), lambda n, t: (n, 0, t)),
            ),
            compiler_params=pltpu.CompilerParams(
                dimension_semantics=("parallel", "parallel"),
                vmem_limit_bytes=vmem_limit_bytes,
            ),
        )(x, scale, bias)

    return out.reshape(N, C, H, W)


def _iln_reference(x, rho, gamma, beta, eps=1e-5):
    """Pure-JAX reference mirroring the PyTorch forward (unbiased variance)."""
    x32 = x.astype(jnp.float32)
    in_mean = jnp.mean(x32, axis=(2, 3), keepdims=True)
    in_var = jnp.var(x32, axis=(2, 3), keepdims=True, ddof=1)
    out_in = (x32 - in_mean) / jnp.sqrt(in_var + eps)
    ln_mean = jnp.mean(x32, axis=(1, 2, 3), keepdims=True)
    ln_var = jnp.var(x32, axis=(1, 2, 3), keepdims=True, ddof=1)
    out_ln = (x32 - ln_mean) / jnp.sqrt(ln_var + eps)
    out = rho * out_in + (1.0 - rho) * out_ln
    return (out * gamma + beta).astype(x.dtype)


if __name__ == "__main__":
    key = jax.random.PRNGKey(0)
    N, C, H, W = 2, 4, 16, 16

    kx, kr, kg, kb = jax.random.split(key, 4)
    x = jax.random.normal(kx, (N, C, H, W), dtype=jnp.float32)

    # Parameter init matching the PyTorch module's __init__ (rho=0, gamma=1,
    # beta=0), then perturbed so every term of the mix is exercised.
    rho = jnp.clip(0.0 + 0.5 * jax.random.uniform(kr, (1, C, 1, 1)), 0.0, 1.0)
    gamma = 1.0 + 0.1 * jax.random.normal(kg, (1, C, 1, 1))
    beta = 0.0 + 0.1 * jax.random.normal(kb, (1, C, 1, 1))

    ref = _iln_reference(x, rho, gamma, beta)

    # Fused single-pass path (default thresholds).
    out = jax.block_until_ready(iln_forward(x, rho, gamma, beta))
    assert out.shape == (N, C, H, W)
    assert jnp.allclose(out, ref, atol=1e-4, rtol=1e-4)

    # Tiled (stats + apply) path, forced with tiny budgets; HW divides thw.
    out_tiled = jax.block_until_ready(
        iln_forward(x, rho, gamma, beta,
                    fused_block_bytes=1024, tile_target_bytes=2048))
    assert jnp.allclose(out_tiled, ref, atol=1e-4, rtol=1e-4)

    # Ragged spatial extent (HW = 300, not a multiple of 128): exercises the
    # full-extent fused block and the masked last tile of the tiled path.
    H2, W2 = 12, 25
    x2 = jax.random.normal(jax.random.PRNGKey(1), (N, C, H2, W2), jnp.float32)
    ref2 = _iln_reference(x2, rho, gamma, beta)
    out2 = jax.block_until_ready(iln_forward(x2, rho, gamma, beta))
    assert jnp.allclose(out2, ref2, atol=1e-4, rtol=1e-4)
    out2_tiled = jax.block_until_ready(
        iln_forward(x2, rho, gamma, beta,
                    fused_block_bytes=1024, tile_target_bytes=2048))
    assert jnp.allclose(out2_tiled, ref2, atol=1e-4, rtol=1e-4)

    print("KERNEL_OK")
</pallas_src>

<mosaic_0001>
module attributes {stable_mosaic.version = 11 : i64} {
  func.func @_iln_fused_kernel(%arg0: i32, %arg1: memref<1x4x256xf32, #tpu.memory_space<vmem>>, %arg2: memref<1x4x1xf32, #tpu.memory_space<vmem>>, %arg3: memref<1x4x1xf32, #tpu.memory_space<vmem>>, %arg4: memref<1x4x1xf32, #tpu.memory_space<vmem>>, %arg5: memref<1x4x256xf32, #tpu.memory_space<vmem>>) attributes {dimension_semantics = [#tpu.dimension_semantics<parallel>], iteration_bounds = array<i64: 2>, scalar_prefetch = 0 : i64, scratch_operands = 0 : i64, tpu.core_type = #tpu.core_type<tc>, window_params = [{transform_indices = @transform_0, window_bounds = array<i64: 1, 4, 256>}, {pipeline_mode = #tpu.pipeline_mode<synchronous>, transform_indices = @transform_1, window_bounds = array<i64: 1, 4, 1>}, {pipeline_mode = #tpu.pipeline_mode<synchronous>, transform_indices = @transform_2, window_bounds = array<i64: 1, 4, 1>}, {pipeline_mode = #tpu.pipeline_mode<synchronous>, transform_indices = @transform_3, window_bounds = array<i64: 1, 4, 1>}, {transform_indices = @transform_4, window_bounds = array<i64: 1, 4, 256>}]} {
    %c0 = arith.constant 0 : index
    %c0_0 = arith.constant 0 : index
    %c0_1 = arith.constant 0 : index
    %0 = vector.load %arg1[%c0, %c0_0, %c0_1] : memref<1x4x256xf32, #tpu.memory_space<vmem>>, vector<1x4x256xf32>
    %cst = arith.constant dense<0.000000e+00> : vector<1x4xf32>
    %1 = vector.multi_reduction <add>, %0, %cst [2] : vector<1x4x256xf32> to vector<1x4xf32>
    %2 = vector.shape_cast %1 : vector<1x4xf32> to vector<1x4x1xf32>
    %3 = arith.mulf %0, %0 : vector<1x4x256xf32>
    %cst_2 = arith.constant dense<0.000000e+00> : vector<1x4xf32>
    %4 = vector.multi_reduction <add>, %3, %cst_2 [2] : vector<1x4x256xf32> to vector<1x4xf32>
    %5 = vector.shape_cast %4 : vector<1x4xf32> to vector<1x4x1xf32>
    %c0_3 = arith.constant 0 : index
    %c0_4 = arith.constant 0 : index
    %c0_5 = arith.constant 0 : index
    %6 = vector.load %arg2[%c0_3, %c0_4, %c0_5] : memref<1x4x1xf32, #tpu.memory_space<vmem>>, vector<1x4x1xf32>
    %c0_6 = arith.constant 0 : index
    %c0_7 = arith.constant 0 : index
    %c0_8 = arith.constant 0 : index
    %7 = vector.load %arg3[%c0_6, %c0_7, %c0_8] : memref<1x4x1xf32, #tpu.memory_space<vmem>>, vector<1x4x1xf32>
    %c0_9 = arith.constant 0 : index
    %c0_10 = arith.constant 0 : index
    %c0_11 = arith.constant 0 : index
    %8 = vector.load %arg4[%c0_9, %c0_10, %c0_11] : memref<1x4x1xf32, #tpu.memory_space<vmem>>, vector<1x4x1xf32>
    %cst_12 = arith.constant 2.560000e+02 : f32
    %9 = vector.broadcast %cst_12 : f32 to vector<1x4x1xf32>
    %10 = arith.divf %2, %9 : vector<1x4x1xf32>
    %cst_13 = arith.constant 2.560000e+02 : f32
    %11 = vector.broadcast %cst_13 : f32 to vector<1x4x1xf32>
    %12 = arith.mulf %11, %10 : vector<1x4x1xf32>
    %13 = arith.mulf %12, %10 : vector<1x4x1xf32>
    %14 = arith.subf %5, %13 : vector<1x4x1xf32>
    %cst_14 = arith.constant 0.000000e+00 : f32
    %15 = vector.broadcast %cst_14 : f32 to vector<1x4x1xf32>
    %16 = arith.maximumf %14, %15 : vector<1x4x1xf32>
    %cst_15 = arith.constant 2.550000e+02 : f32
    %17 = vector.broadcast %cst_15 : f32 to vector<1x4x1xf32>
    %18 = arith.divf %16, %17 : vector<1x4x1xf32>
    %cst_16 = arith.constant 9.99999974E-6 : f32
    %19 = vector.broadcast %cst_16 : f32 to vector<1x4x1xf32>
    %20 = arith.addf %18, %19 : vector<1x4x1xf32>
    %21 = math.rsqrt %20 : vector<1x4x1xf32>
    %cst_17 = arith.constant dense<0.000000e+00> : vector<1x1xf32>
    %22 = vector.multi_reduction <add>, %2, %cst_17 [1] : vector<1x4x1xf32> to vector<1x1xf32>
    %23 = vector.shape_cast %22 : vector<1x1xf32> to vector<1x1x1xf32>
    %cst_18 = arith.constant dense<0.000000e+00> : vector<1x1xf32>
    %24 = vector.multi_reduction <add>, %5, %cst_18 [1] : vector<1x4x1xf32> to vector<1x1xf32>
    %25 = vector.shape_cast %24 : vector<1x1xf32> to vector<1x1x1xf32>
    %cst_19 = arith.constant 1.024000e+03 : f32
    %26 = vector.broadcast %cst_19 : f32 to vector<1x1x1xf32>
    %27 = arith.divf %23, %26 : vector<1x1x1xf32>
    %cst_20 = arith.constant 1.024000e+03 : f32
    %28 = vector.broadcast %cst_20 : f32 to vector<1x1x1xf32>
    %29 = arith.mulf %28, %27 : vector<1x1x1xf32>
    %30 = arith.mulf %29, %27 : vector<1x1x1xf32>
    %31 = arith.subf %25, %30 : vector<1x1x1xf32>
    %cst_21 = arith.constant 0.000000e+00 : f32
    %32 = vector.broadcast %cst_21 : f32 to vector<1x1x1xf32>
    %33 = arith.maximumf %31, %32 : vector<1x1x1xf32>
    %cst_22 = arith.constant 1.023000e+03 : f32
    %34 = vector.broadcast %cst_22 : f32 to vector<1x1x1xf32>
    %35 = arith.divf %33, %34 : vector<1x1x1xf32>
    %cst_23 = arith.constant 9.99999974E-6 : f32
    %36 = vector.broadcast %cst_23 : f32 to vector<1x1x1xf32>
    %37 = arith.addf %35, %36 : vector<1x1x1xf32>
    %38 = math.rsqrt %37 : vector<1x1x1xf32>
    %39 = arith.mulf %6, %21 : vector<1x4x1xf32>
    %cst_24 = arith.constant 1.000000e+00 : f32
    %40 = vector.broadcast %cst_24 : f32 to vector<1x4x1xf32>
    %41 = arith.subf %40, %6 : vector<1x4x1xf32>
    %42 = vector.broadcast %38 : vector<1x1x1xf32> to vector<1x4x1xf32>
    %43 = arith.mulf %41, %42 : vector<1x4x1xf32>
    %44 = arith.addf %39, %43 : vector<1x4x1xf32>
    %45 = arith.mulf %6, %10 : vector<1x4x1xf32>
    %46 = arith.mulf %45, %21 : vector<1x4x1xf32>
    %cst_25 = arith.constant 1.000000e+00 : f32
    %47 = vector.broadcast %cst_25 : f32 to vector<1x4x1xf32>
    %48 = arith.subf %47, %6 : vector<1x4x1xf32>
    %49 = vector.broadcast %27 : vector<1x1x1xf32> to vector<1x4x1xf32>
    %50 = arith.mulf %48, %49 : vector<1x4x1xf32>
    %51 = vector.broadcast %38 : vector<1x1x1xf32> to vector<1x4x1xf32>
    %52 = arith.mulf %50, %51 : vector<1x4x1xf32>
    %53 = arith.addf %46, %52 : vector<1x4x1xf32>
    %cst_26 = arith.constant 0.000000e+00 : f32
    %54 = vector.broadcast %cst_26 : f32 to vector<1x4x1xf32>
    %55 = arith.subf %54, %53 : vector<1x4x1xf32>
    %56 = arith.mulf %7, %44 : vector<1x4x1xf32>
    %57 = arith.mulf %7, %55 : vector<1x4x1xf32>
    %58 = arith.addf %57, %8 : vector<1x4x1xf32>
    %c0_27 = arith.constant 0 : index
    %c0_28 = arith.constant 0 : index
    %c0_29 = arith.constant 0 : index
    %59 = vector.load %arg1[%c0_27, %c0_28, %c0_29] : memref<1x4x256xf32, #tpu.memory_space<vmem>>, vector<1x4x256xf32>
    %60 = vector.broadcast %56 : vector<1x4x1xf32> to vector<1x4x256xf32>
    %61 = arith.mulf %59, %60 : vector<1x4x256xf32>
    %62 = vector.broadcast %58 : vector<1x4x1xf32> to vector<1x4x256xf32>
    %63 = arith.addf %61, %62 : vector<1x4x256xf32>
    %c0_30 = arith.constant 0 : index
    %c0_31 = arith.constant 0 : index
    %c0_32 = arith.constant 0 : index
    %64 = vector.load %arg5[%c0_30, %c0_31, %c0_32] : memref<1x4x256xf32, #tpu.memory_space<vmem>>, vector<1x4x256xf32>
    tpu.vector_store %arg5[%c0_30, %c0_31, %c0_32], %63 {strides = array<i32>} : memref<1x4x256xf32, #tpu.memory_space<vmem>>, vector<1x4x256xf32>,
    return
  }
  func.func @transform_0(%arg0: i32) -> (i32, i32, i32) {
    %c0_i32 = arith.constant 0 : i32
    %c0_i32_0 = arith.constant 0 : i32
    %c0_i32_1 = arith.constant 0 : i32
    return %arg0, %c0_i32, %c0_i32_0 : i32, i32, i32
  }
  func.func @transform_1(%arg0: i32) -> (i32, i32, i32) {
    %c0_i32 = arith.constant 0 : i32
    %c0_i32_0 = arith.constant 0 : i32
    %c0_i32_1 = arith.constant 0 : i32
    %c0_i32_2 = arith.constant 0 : i32
    return %c0_i32, %c0_i32_0, %c0_i32_1 : i32, i32, i32
  }
  func.func @transform_2(%arg0: i32) -> (i32, i32, i32) {
    %c0_i32 = arith.constant 0 : i32
    %c0_i32_0 = arith.constant 0 : i32
    %c0_i32_1 = arith.constant 0 : i32
    %c0_i32_2 = arith.constant 0 : i32
    return %c0_i32, %c0_i32_0, %c0_i32_1 : i32, i32, i32
  }
  func.func @transform_3(%arg0: i32) -> (i32, i32, i32) {
    %c0_i32 = arith.constant 0 : i32
    %c0_i32_0 = arith.constant 0 : i32
    %c0_i32_1 = arith.constant 0 : i32
    %c0_i32_2 = arith.constant 0 : i32
    return %c0_i32, %c0_i32_0, %c0_i32_1 : i32, i32, i32
  }
  func.func @transform_4(%arg0: i32) -> (i32, i32, i32) {
    %c0_i32 = arith.constant 0 : i32
    %c0_i32_0 = arith.constant 0 : i32
    %c0_i32_1 = arith.constant 0 : i32
    return %arg0, %c0_i32, %c0_i32_0 : i32, i32, i32
  }
}

</mosaic_0001>

<llo_original>
// kernel: tpu_custom_call.1
$region0: #{tpu_custom_call.1}
  #allocation0 [shape = 'u32[]', space=smem, size = 0x4, offset = 0x4, fixed_abs, tag = 'smem constant byte address 0x4 - core index']
  #allocation1 [shape = 'u32[144,128]{1,0:T(1,128)}', space=vmem, size = 0x12000, scoped, tag = 'internal scratch']
  %s0 = inlined_call_operand.hbm [shape: f32[2,4,256], index: 0, kind: input, shape index: {}]
  %s1 = inlined_call_operand.vmem [shape: f32[1,4,1], index: 1, kind: input, shape index: {}]
  %s2 = inlined_call_operand.vmem [shape: f32[1,4,1], index: 2, kind: input, shape index: {}]
  %s3 = inlined_call_operand.vmem [shape: f32[1,4,1], index: 3, kind: input, shape index: {}]
  %s4 = inlined_call_operand.hbm [shape: f32[2,4,256], index: 4, kind: output, shape index: {}]
  %s5 = sld [smem:[#allocation0]]
  $region53: #{tpu_custom_call.1} parent=0
    _
  %s7 = ssub.s32 1, %s5
  %s8 = scalar_select 0, %s7, %s5
  $region1: #{tpu_custom_call.1} parent=0
    #allocation2 [shape = 'u8[8192]{0}', space=vmem, size = 0x2000, scoped, tag = 'input window, operand 0']
    #allocation3 [shape = 's32[2]{0}', space=sflag, size = 0x8, scoped, tag = 'scoped memory for tpu_custom_call.1']
    #allocation4 [shape = 's32[2]{0}', space=sflag, size = 0x8, scoped, tag = 'scoped memory for tpu_custom_call.1']
    #allocation5 [shape = 'u8[8192]{0}', space=vmem, size = 0x2000, scoped, tag = 'output window, operand 0']
    %9 = vsyncpa [#allocation3], 0
    %s10 = scalar_lea.sflag [#allocation3], 1
    %11 = vsyncpa %s10, 0
    %12 = vsyncpa [#allocation4], 0
    %s13 = scalar_lea.sflag [#allocation4], 1
    %14 = vsyncpa %s13, 0
    loop: start=0, step=1, limit=4
    $region2: #{tpu_custom_call.1} parent=1 // loop_pre_header
      _
    $region3: #{tpu_custom_call.1} parent=1 // loop_header
      %s16 = sphi 0, %s20
      %p17 = scmp.ge.s32.totalorder %s16, 4
      %s26 = sphi 0, %s28
      %s29 = sphi 0, %s26
      %s30 = sphi 0, %s29
      %s46 = sphi 0, %s30
      %s50 = sphi 0, %s50
      %s52 = sphi 0, %s50
      %s53 = sphi 0, %s52
      %s67 = sphi 0, %s53
      %s71 = sphi 0, %s71
      %s73 = sphi 0, %s71
      %s74 = sphi 0, %s73
      %s88 = sphi 0, %s74
      %s92 = sphi 0, %s92
      %s94 = sphi 0, %s92
      %s95 = sphi 0, %s94
      %s109 = sphi 0, %s95
      %s115 = sphi 0, %s117
      %s118 = sphi 0, %s115
      %s119 = sphi 0, %s118
      %s135 = sphi 0, %s119
    $region4: #{tpu_custom_call.1} parent=1 // loop_header_branch
      %19 = sbr.rel (%p17) target = $region8
    $region5: #{tpu_custom_call.1} parent=1 // loop_body
      %s21 = ssub.s32 %s16, 1
      %s22 = ssub.s32 %s16, 2
      %s23 = sadd.s32 %s16, 1
      %s24 = ssub.s32 %s16, %s23
      %p25 = scmp.eq.s32.totalorder %s24, 0
      %s27 = sadd.s32 %s26, 1
      %s28 = scalar_select %p25, %s26, %s27
      %p31 = pneg %p25
      %p32 = scmp.eq.s32.totalorder %s16, 1
      %p33 = por %p31, %p32
      %p34 = scmp.ne.s32.totalorder %s26, %s29
      %p35 = scmp.eq.s32.totalorder %s16, 0
      %p36 = por %p34, %p35
      %p37 = scmp.ne.s32.totalorder %s26, %s29
      %p38 = scmp.eq.s32.totalorder %s21, 1
      %p39 = por %p37, %p38
      %p40 = scmp.ne.s32.totalorder %s29, %s30
      %p41 = scmp.eq.s32.totalorder %s21, 0
      %p42 = por %p40, %p41
      %p43 = scmp.ne.s32.totalorder %s29, %s30
      %p44 = scmp.eq.s32.totalorder %s22, 1
      %p45 = por %p43, %p44
      %p47 = scmp.ne.s32.totalorder %s30, %s46
      %p48 = scmp.eq.s32.totalorder %s22, 0
      %p49 = por %p47, %p48
      %s51 = sadd.s32 %s50, 1
      %p54 = scmp.eq.s32.totalorder %s16, 1
      %p55 = scmp.ne.s32.totalorder %s50, %s52
      %p56 = scmp.eq.s32.totalorder %s16, 0
      %p57 = por %p55, %p56
      %p58 = scmp.ne.s32.totalorder %s50, %s52
      %p59 = scmp.eq.s32.totalorder %s21, 1
      %p60 = por %p58, %p59
      %p61 = scmp.ne.s32.totalorder %s52, %s53
      %p62 = scmp.eq.s32.totalorder %s21, 0
      %p63 = por %p61, %p62
      %p64 = scmp.ne.s32.totalorder %s52, %s53
      %p65 = scmp.eq.s32.totalorder %s22, 1
      %p66 = por %p64, %p65
      %p68 = scmp.ne.s32.totalorder %s53, %s67
      %p69 = scmp.eq.s32.totalorder %s22, 0
      %p70 = por %p68, %p69
      %s72 = sadd.s32 %s71, 1
      %p75 = scmp.eq.s32.totalorder %s16, 1
      %p76 = scmp.ne.s32.totalorder %s71, %s73
      %p77 = scmp.eq.s32.totalorder %s16, 0
      %p78 = por %p76, %p77
      %p79 = scmp.ne.s32.totalorder %s71, %s73
      %p80 = scmp.eq.s32.totalorder %s21, 1
      %p81 = por %p79, %p80
      %p82 = scmp.ne.s32.totalorder %s73, %s74
      %p83 = scmp.eq.s32.totalorder %s21, 0
      %p84 = por %p82, %p83
      %p85 = scmp.ne.s32.totalorder %s73, %s74
      %p86 = scmp.eq.s32.totalorder %s22, 1
      %p87 = por %p85, %p86
      %p89 = scmp.ne.s32.totalorder %s74, %s88
      %p90 = scmp.eq.s32.totalorder %s22, 0
      %p91 = por %p89, %p90
      %s93 = sadd.s32 %s92, 1
      %p96 = scmp.eq.s32.totalorder %s16, 1
      %p97 = scmp.ne.s32.totalorder %s92, %s94
      %p98 = scmp.eq.s32.totalorder %s16, 0
      %p99 = por %p97, %p98
      %p100 = scmp.ne.s32.totalorder %s92, %s94
      %p101 = scmp.eq.s32.totalorder %s21, 1
      %p102 = por %p100, %p101
      %p103 = scmp.ne.s32.totalorder %s94, %s95
      %p104 = scmp.eq.s32.totalorder %s21, 0
      %p105 = por %p103, %p104
      %p106 = scmp.ne.s32.totalorder %s94, %s95
      %p107 = scmp.eq.s32.totalorder %s22, 1
      %p108 = por %p106, %p107
      %p110 = scmp.ne.s32.totalorder %s95, %s109
      %p111 = scmp.eq.s32.totalorder %s22, 0
      %p112 = por %p110, %p111
      %s113 = ssub.s32 %s16, %s23
      %p114 = scmp.eq.s32.totalorder %s113, 0
      %s116 = sadd.s32 %s115, 1
      %s117 = scalar_select %p114, %s115, %s116
      %p120 = pneg %p114
      %p121 = scmp.eq.s32.totalorder %s16, 1
      %p122 = por %p120, %p121
      %p123 = scmp.ne.s32.totalorder %s115, %s118
      %p124 = scmp.eq.s32.totalorder %s16, 0
      %p125 = por %p123, %p124
      %p126 = scmp.ne.s32.totalorder %s115, %s118
      %p127 = scmp.eq.s32.totalorder %s21, 1
      %p128 = por %p126, %p127
      %p129 = scmp.ne.s32.totalorder %s118, %s119
      %p130 = scmp.eq.s32.totalorder %s21, 0
      %p131 = por %p129, %p130
      %p132 = scmp.ne.s32.totalorder %s118, %s119
      %p133 = scmp.eq.s32.totalorder %s22, 1
      %p134 = por %p132, %p133
      %p136 = scmp.ne.s32.totalorder %s119, %s135
      %p137 = scmp.eq.s32.totalorder %s22, 0
      %p138 = por %p136, %p137
      %p139 = scmp.le.s32.totalorder 1, %s16
      %p140 = scmp.lt.s32.totalorder %s16, 3
      %p141 = pnand %p139, %p140
      %p142 = pneg %p141
      // Predicated region
      $region9: #{tpu_custom_call.1} parent=5 // pred_check
        _
      $region10: #{tpu_custom_call.1} parent=5 // pred_check_branch
        %144 = sbr.rel (%p141) target = $region12
      $region11: #{tpu_custom_call.1} parent=5 // pred_region
        %s145 = ssub.s32 %s16, 1
        // Predicated region
        $region13: #{tpu_custom_call.1} parent=11 // pred_check
          %p146 = pneg %p63
        $region14: #{tpu_custom_call.1} parent=11 // pred_check_branch
          %148 = sbr.rel (%p146) target = $region16
        $region15: #{tpu_custom_call.1} parent=11 // pred_region
          _
        $region16: #{tpu_custom_call.1} parent=11 // pred_fallthru
          _
        // Predicated region
        $region17: #{tpu_custom_call.1} parent=11 // pred_check
          %p149 = pneg %p84
        $region18: #{tpu_custom_call.1} parent=11 // pred_check_branch
          %151 = sbr.rel (%p149) target = $region20
        $region19: #{tpu_custom_call.1} parent=11 // pred_region
          _
        $region20: #{tpu_custom_call.1} parent=11 // pred_fallthru
          _
        // Predicated region
        $region21: #{tpu_custom_call.1} parent=11 // pred_check
          %p152 = pneg %p105
        $region22: #{tpu_custom_call.1} parent=11 // pred_check_branch
          %154 = sbr.rel (%p152) target = $region24
        $region23: #{tpu_custom_call.1} parent=11 // pred_region
          _
        $region24: #{tpu_custom_call.1} parent=11 // pred_fallthru
          _
      $region12: #{tpu_custom_call.1} parent=5 // pred_fallthru
        _
      %p155 = scmp.lt.s32.totalorder %s16, 2
      // Predicated region
      $region25: #{tpu_custom_call.1} parent=5 // pred_check
        %p156 = pneg %p155
      $region26: #{tpu_custom_call.1} parent=5 // pred_check_branch
        %158 = sbr.rel (%p156) target = $region28
      $region27: #{tpu_custom_call.1} parent=5 // pred_region
        // Predicated region
        $region29: #{tpu_custom_call.1} parent=27 // pred_check
          %p159 = pneg %p36
        $region30: #{tpu_custom_call.1} parent=27 // pred_check_branch
          %161 = sbr.rel (%p159) target = $region32
        $region31: #{tpu_custom_call.1} parent=27 // pred_region
          %s162 = sand.u32 %s26, 1
          %s163 = scalar_lea.sflag [#allocation3], %s162
          %s164 = sand.u32 %s26, 1
          %s165 = smul.addr %s164, 8
          %s166 = scalar_lea.vmem [#allocation2], %s165
          %s168 = ssub.s32 128, 128
          %169 = vsyncadd %s163, %s168
          %s170 = smul.addr %s16, 2
          %s171 = smul.addr %s170, 64
          %s172 = scalar_lea.hbm %s0, %s171
          %s174 = sshll.u32 %s166, 4
          %s175 = int_to_ptr.vmem [resolvable:$true] %s174
          %177 = dma.hbm_to_vmem [thread:$0]  %s172, 128, %s175, %s163
        $region32: #{tpu_custom_call.1} parent=27 // pred_fallthru
          _
      $region28: #{tpu_custom_call.1} parent=5 // pred_fallthru
        _
      %p178 = scmp.le.s32.totalorder 1, %s16
      %p179 = scmp.lt.s32.totalorder %s16, 3
      %p180 = pnand %p178, %p179
      %p181 = pneg %p180
      // Predicated region
      $region33: #{tpu_custom_call.1} parent=5 // pred_check
        _
      $region34: #{tpu_custom_call.1} parent=5 // pred_check_branch
        %183 = sbr.rel (%p180) target = $region36
      $region35: #{tpu_custom_call.1} parent=5 // pred_region
        %s184 = ssub.s32 %s16, 1
        %s185 = sand.u32 %s29, 1
        %s186 = scalar_lea.sflag [#allocation3], %s185
        %s187 = sand.u32 %s29, 1
        %s188 = smul.addr %s187, 8
        %s189 = scalar_lea.vmem [#allocation2], %s188
        // Predicated region
        $region37: #{tpu_custom_call.1} parent=35 // pred_check
          %p190 = pneg %p42
        $region38: #{tpu_custom_call.1} parent=35 // pred_check_branch
          %192 = sbr.rel (%p190) target = $region40
        $region39: #{tpu_custom_call.1} parent=35 // pred_region
          %193 = dma.done %s186, 128
        $region40: #{tpu_custom_call.1} parent=35 // pred_fallthru
          _
        %s194 = sand.u32 %s29, 1
        %s195 = scalar_lea.sflag [#allocation3], %s194
        %s196 = sand.u32 %s29, 1
        %s197 = smul.addr %s196, 8
        %s198 = scalar_lea.vmem [#allocation2], %s197
        %p199 = pneg %p42
        %p200 = pneg %p39
        %p201 = pneg %p63
        %p202 = pneg %p60
        %p203 = pneg %p84
        %p204 = pneg %p81
        %p205 = pneg %p105
        %p206 = pneg %p102
        %p207 = pneg %p131
        %p208 = pneg %p128
        %s209 = sand.u32 %s118, 1
        %s210 = scalar_lea.sflag [#allocation4], %s209
        %s211 = sand.u32 %s118, 1
        %s212 = smul.addr %s211, 8
        %s213 = scalar_lea.vmem [#allocation5], %s212
        %v214 = vld [vmem:[%s189] sm:$0xff]
        %v216 = vcombine.high %v214, %v214
        %vm218 = vcmask 1043456
        %v219 = vsel %vm218, %v214, 0.0
        %v220 = vsel %vm218, %v216, 0.0
        %v221 = vadd.f32 %v219, %v220
        %222 = vadd.xlane.f32.xlu0 %v221
        %v223 = vpop.xlane.xlu0 %222
        %v224 = vmul.f32 %v214, %v214
        %v226 = vcombine.high %v224, %v224
        %v228 = vsel %vm218, %v224, 0.0
        %v229 = vsel %vm218, %v226, 0.0
        %v230 = vadd.f32 %v228, %v229
        %231 = vadd.xlane.f32.xlu0 %v230
        %v232 = vpop.xlane.xlu0 %231
        %v233 = vld [vmem:[%s1] sm:$0xf]
        %v234 = vld [vmem:[%s2] sm:$0xf]
        %v235 = vld [vmem:[%s3] sm:$0xf]
        %v236 = vrcp.pop 256.0
        %v237 = vmul.f32 %v223, %v236
        %v238 = vmul.f32 %v237, 256.0
        %v239 = vmul.f32 %v238, %v237
        %v240 = vsub.f32 %v232, %v239
        %v241 = vmax.f32 %v240, 0.0
        %v242 = vrcp.pop 255.0
        %v243 = vmul.f32 %v241, %v242
        %v244 = vadd.f32 %v243, 1e-05
        %v245 = vrsqrt.pop %v244
        %v246 = vsel %vm218, %v223, 0.0
        %v247 = vrot.slane %v246, 4
        %v248 = vadd.f32 %v246, %v247
        %v249 = vrot.slane %v248, 2
        %v250 = vadd.f32 %v248, %v249
        %v251 = vrot.slane %v250, 1
        %v252 = vadd.f32 %v250, %v251
        %v253 = vsel %vm218, %v232, 0.0
        %v254 = vrot.slane %v253, 4
        %v255 = vadd.f32 %v253, %v254
        %v256 = vrot.slane %v255, 2
        %v257 = vadd.f32 %v255, %v256
        %v258 = vrot.slane %v257, 1
        %v259 = vadd.f32 %v257, %v258
        %v260 = vrcp.pop 1024.0
        %v261 = vmul.f32 %v252, %v260
        %v262 = vmul.f32 %v261, 1024.0
        %v263 = vmul.f32 %v262, %v261
        %v264 = vsub.f32 %v259, %v263
        %v265 = vmax.f32 %v264, 0.0
        %v266 = vrcp.pop 1023.0
        %v267 = vmul.f32 %v265, %v266
        %v268 = vadd.f32 %v267, 1e-05
        %v269 = vrsqrt.pop %v268
        %v270 = vmul.f32 %v233, %v245
        %v271 = vsub.f32 1.0, %v233
        %v272 = vmul.f32 %v271, %v269
        %v273 = vadd.f32 %v270, %v272
        %v274 = vmul.f32 %v233, %v237
        %v275 = vmul.f32 %v274, %v245
        %v276 = vmul.f32 %v271, %v261
        %v277 = vmul.f32 %v276, %v269
        %v278 = vadd.f32 %v275, %v277
        %v279 = vsub.f32 0.0, %v278
        %v280 = vmul.f32 %v234, %v273
        %v281 = vmul.f32 %v234, %v279
        %v282 = vadd.f32 %v281, %v235
        %284 = vset.pattern.permute.xlu0 0
        %285 = vperm.xlu0 %284, %v280
        %v286 = vpop.permute.xlu0 %285
        %v288 = vunpack.c.l.s4 839922192
        %v289 = vunpack.c.0.s8 %v288
        %v290 = vlaneseq
        %v291 = vshrl.u32 %v290, 7
        %v292 = vsub.s32 %v289, %v291
        %v293 = vrot.slane %v286, %v292
        %v295 = vmul.f32 %v214, %v293
        %297 = vset.pattern.permute.xlu0 0
        %298 = vperm.xlu0 %297, %v282
        %v299 = vpop.permute.xlu0 %298
        %v301 = vunpack.c.l.s4 839922192
        %v302 = vunpack.c.0.s8 %v301
        %v303 = vlaneseq
        %v304 = vshrl.u32 %v303, 7
        %v305 = vsub.s32 %v302, %v304
        %v306 = vrot.slane %v299, %v305
        %v308 = vadd.f32 %v295, %v306
        %309 = vst [vmem:[%s213] sm:$0xff] %v308
        %s310 = sand.u32 %s118, 1
        %s311 = scalar_lea.sflag [#allocation4], %s310
        %s312 = sand.u32 %s118, 1
        %s313 = smul.addr %s312, 8
        %s314 = scalar_lea.vmem [#allocation5], %s313
        // Predicated region
        $region41: #{tpu_custom_call.1} parent=35 // pred_check
          %p315 = pneg %p128
        $region42: #{tpu_custom_call.1} parent=35 // pred_check_branch
          %317 = sbr.rel (%p315) target = $region44
        $region43: #{tpu_custom_call.1} parent=35 // pred_region
          %s319 = ssub.s32 128, 128
          %320 = vsyncadd %s311, %s319
          %s321 = smul.addr %s21, 2
          %s322 = smul.addr %s321, 64
          %s323 = scalar_lea.hbm %s4, %s322
          %s325 = sshll.u32 %s314, 4
          %s326 = int_to_ptr.vmem [resolvable:$true] %s325
          %328 = dma.vmem_to_hbm [thread:$0]  %s326, 128, %s323, %s311
        $region44: #{tpu_custom_call.1} parent=35 // pred_fallthru
          _
      $region36: #{tpu_custom_call.1} parent=5 // pred_fallthru
        _
      %p329 = scmp.le.s32.totalorder 2, %s16
      // Predicated region
      $region45: #{tpu_custom_call.1} parent=5 // pred_check
        %p330 = pneg %p329
      $region46: #{tpu_custom_call.1} parent=5 // pred_check_branch
        %332 = sbr.rel (%p330) target = $region48
      $region47: #{tpu_custom_call.1} parent=5 // pred_region
        %s333 = ssub.s32 %s16, 2
        // Predicated region
        $region49: #{tpu_custom_call.1} parent=47 // pred_check
          %p334 = pneg %p134
        $region50: #{tpu_custom_call.1} parent=47 // pred_check_branch
          %336 = sbr.rel (%p334) target = $region52
        $region51: #{tpu_custom_call.1} parent=47 // pred_region
          %s337 = sand.u32 %s119, 1
          %s338 = scalar_lea.sflag [#allocation4], %s337
          %s339 = sand.u32 %s119, 1
          %s340 = smul.addr %s339, 8
          %s341 = scalar_lea.vmem [#allocation5], %s340
          %342 = dma.done %s338, 128
        $region52: #{tpu_custom_call.1} parent=47 // pred_fallthru
          _
      $region48: #{tpu_custom_call.1} parent=5 // pred_fallthru
        _
    $region6: #{tpu_custom_call.1} parent=1 // loop_footer
      %s20 = sadd.s32 1, %s16
    $region7: #{tpu_custom_call.1} parent=1 // loop_footer_branch
      %15 = sbr.rel target = $region3
    $region8: #{tpu_custom_call.1} parent=1 // loop_exit
      _
    %343 = vsyncpa [#allocation3], 1
    %s344 = scalar_lea.sflag [#allocation3], 1
    %345 = vsyncpa %s344, 1
    %346 = vsyncpa [#allocation4], 1
    %s347 = scalar_lea.sflag [#allocation4], 1
    %348 = vsyncpa %s347, 1

</llo_original>
